<compile_context>
chip_gen: v7x
topology: tpu7x:2x2x1
jax: 0.10.0
libtpu: 0.0.40
codegen_flags: <defaults>
</compile_context>

<pallas_src>
import functools

import jax
import jax.numpy as jnp
from jax import lax
from jax.experimental import pallas as pl
from jax.experimental.pallas import tpu as pltpu


# ---------------------------------------------------------------------------
# Kernel
# ---------------------------------------------------------------------------

def _spec_layernorm(v, gamma, beta, eps):
    """Spec LayerNorm: mean over last dim, unbiased std, eps inside the sqrt."""
    d = v.shape[-1]
    mean = jnp.mean(v, axis=-1, keepdims=True)
    centered = v - mean
    var_unbiased = jnp.sum(centered * centered, axis=-1, keepdims=True) / max(d - 1, 1)
    inv_std = lax.rsqrt(var_unbiased + eps)              # EUP, not a vector divide
    return gamma * (centered * inv_std) + beta


def _encoder_kernel(x_ref, gammas_ref, betas_ref, ws_ref, bs_ref,
                    ng_ref, nb_ref, o_ref, *, eps, n_layers):
    """All N stand-in layers + final LayerNorm on one resident (tm, D) row tile."""
    x = x_ref[...].astype(jnp.float32)                    # (tm, D), stays on-chip

    # Static unroll over layers (N is small); weights/LN params are resident.
    for n in range(n_layers):
        x_norm = _spec_layernorm(x, gammas_ref[n], betas_ref[n], eps)
        # Dense sublayer on the MXU: bf16 operands, f32 accumulation.
        y = jnp.dot(x_norm.astype(jnp.bfloat16), ws_ref[n],
                    preferred_element_type=jnp.float32)
        # dropout (eval) = identity; residual add in f32.
        x = x + y + bs_ref[n]

    o_ref[...] = _spec_layernorm(x, ng_ref[...], nb_ref[...], eps).astype(o_ref.dtype)


# ---------------------------------------------------------------------------
# Wrapper
# ---------------------------------------------------------------------------

def _round_up(n, m):
    return ((n + m - 1) // m) * m


def _vmem_limit(nbytes):
    """Request what we need + headroom, capped below physical VMEM."""
    try:
        cap = pltpu.get_tpu_info().vmem_capacity_bytes - (16 << 20)
    except Exception:
        cap = 48 << 20                    # conservative: fits v7x's 64 MiB budget
    cap = max(cap, 32 << 20)
    return int(max(32 << 20, min(nbytes + (8 << 20), cap)))


def encoder_forward(x, layer_params, norm_gamma, norm_beta, *, eps=1e-6,
                    tile_rows=512):
    """Encoder.forward: N stand-in layers + final LayerNorm in ONE pallas_call.

    x: (B, S, D) f32.  layer_params: list of (gamma, beta, w_bf16, bias).
    """
    B, S, D = x.shape
    N = len(layer_params)
    rows = B * S
    x2 = x.reshape(rows, D)

    # Stack per-layer params so they can sit resident in VMEM as single arrays.
    gammas = jnp.stack([p[0] for p in layer_params])      # (N, 1, D) f32
    betas = jnp.stack([p[1] for p in layer_params])       # (N, 1, D) f32
    ws = jnp.stack([p[2] for p in layer_params])          # (N, D, D) bf16
    biases = jnp.stack([p[3] for p in layer_params])      # (N, 1, D) f32

    # Row-tile selection: big tiles for HBM efficiency, but guarantee >=2 grid
    # programs along the 'parallel' axis so both v7x TensorCores are used.
    tm = _round_up(min(tile_rows, _round_up(rows, 8)), 8)
    rows_p = _round_up(rows, tm)
    if rows_p // tm < 2 and tm >= 16:
        tm = _round_up(tm // 2, 8)
        rows_p = _round_up(rows, tm)

    # Pad rows ONCE for the whole layer stack (sliced back once at the end).
    if rows_p != rows:
        x2 = jnp.pad(x2, ((0, rows_p - rows), (0, 0)))

    grid = (rows_p // tm,)
    kernel = functools.partial(_encoder_kernel, eps=eps, n_layers=N)

    vmem = _vmem_limit(
        2 * tm * D * 4            # x row tiles (double-buffered, f32)
        + 2 * tm * D * 4          # out row tiles
        + 2 * N * D * D * 2       # resident bf16 weights (worst-case 2x)
        + 2 * 3 * N * D * 4       # gammas / betas / biases
        + 2 * 2 * D * 4           # final norm gamma / beta
        + 4 * tm * D * 4)         # in-kernel temporaries
    out = pl.pallas_call(
        kernel,
        out_shape=jax.ShapeDtypeStruct((rows_p, D), x2.dtype),
        grid_spec=pltpu.PrefetchScalarGridSpec(
            num_scalar_prefetch=0,
            grid=grid,
            in_specs=[
                pl.BlockSpec((tm, D), lambda i: (i, 0)),        # x row tile
                pl.BlockSpec((N, 1, D), lambda i: (0, 0, 0)),   # gammas (resident)
                pl.BlockSpec((N, 1, D), lambda i: (0, 0, 0)),   # betas  (resident)
                pl.BlockSpec((N, D, D), lambda i: (0, 0, 0)),   # weights (resident, bf16)
                pl.BlockSpec((N, 1, D), lambda i: (0, 0, 0)),   # biases (resident)
                pl.BlockSpec((1, D), lambda i: (0, 0)),         # final gamma
                pl.BlockSpec((1, D), lambda i: (0, 0)),         # final beta
            ],
            out_specs=pl.BlockSpec((tm, D), lambda i: (i, 0)),
        ),
        compiler_params=pltpu.CompilerParams(
            dimension_semantics=("parallel",),
            vmem_limit_bytes=vmem),
    )(x2, gammas, betas, ws, biases, norm_gamma, norm_beta)

    return out[:rows].reshape(B, S, D)


# ---------------------------------------------------------------------------
# Pure-JAX reference (same math path, incl. bf16 matmul operands)
# ---------------------------------------------------------------------------

def _reference(x, layer_params, norm_gamma, norm_beta, eps=1e-6):
    def ln(v, g, b):
        mean = jnp.mean(v, axis=-1, keepdims=True)
        c = v - mean
        var = jnp.sum(c * c, axis=-1, keepdims=True) / (v.shape[-1] - 1)
        return g * (c / jnp.sqrt(var + eps)) + b

    B, S, D = x.shape
    v = x.reshape(B * S, D)
    for (g, bt, w, bias) in layer_params:
        xn = ln(v, g, bt)
        y = jnp.dot(xn.astype(jnp.bfloat16), w,
                    preferred_element_type=jnp.float32) + bias
        v = v + y
    return ln(v, norm_gamma, norm_beta).reshape(B, S, D)


if __name__ == "__main__":
    B, S, D, N = 2, 8, 128, 2
    key = jax.random.PRNGKey(0)
    kx, *kws = jax.random.split(key, 1 + N)

    x = jax.random.normal(kx, (B, S, D), dtype=jnp.float32)

    layer_params = []
    for n in range(N):
        gamma = jnp.ones((1, D), dtype=jnp.float32)          # LayerNorm a_2 init
        beta = jnp.zeros((1, D), dtype=jnp.float32)          # LayerNorm b_2 init
        # Dense stand-in for the (unspecified) encoder layer; cast to bf16 ONCE
        # outside the kernel so the MXU gets bf16 operands with no per-step cast.
        w = (jax.random.normal(kws[n], (D, D), dtype=jnp.float32)
             * (1.0 / jnp.sqrt(D))).astype(jnp.bfloat16)
        bias = jnp.zeros((1, D), dtype=jnp.float32)
        layer_params.append((gamma, beta, w, bias))

    norm_gamma = jnp.ones((1, D), dtype=jnp.float32)
    norm_beta = jnp.zeros((1, D), dtype=jnp.float32)

    out = encoder_forward(x, layer_params, norm_gamma, norm_beta)
    out = jax.block_until_ready(out)

    ref = _reference(x, layer_params, norm_gamma, norm_beta)
    assert out.shape == (B, S, D)
    assert jnp.allclose(out, ref, atol=1e-2, rtol=1e-2), "mismatch vs reference"

    print("KERNEL_OK")
</pallas_src>

<mosaic_0001>
module attributes {stable_mosaic.version = 11 : i64} {
  func.func @_encoder_kernel(%arg0: i32, %arg1: memref<8x128xf32, #tpu.memory_space<vmem>>, %arg2: memref<2x1x128xf32, #tpu.memory_space<vmem>>, %arg3: memref<2x1x128xf32, #tpu.memory_space<vmem>>, %arg4: memref<2x128x128xbf16, #tpu.memory_space<vmem>>, %arg5: memref<2x1x128xf32, #tpu.memory_space<vmem>>, %arg6: memref<1x128xf32, #tpu.memory_space<vmem>>, %arg7: memref<1x128xf32, #tpu.memory_space<vmem>>, %arg8: memref<8x128xf32, #tpu.memory_space<vmem>>) attributes {dimension_semantics = [#tpu.dimension_semantics<parallel>], iteration_bounds = array<i64: 2>, scalar_prefetch = 0 : i64, scratch_operands = 0 : i64, tpu.core_type = #tpu.core_type<tc>, window_params = [{transform_indices = @transform_0, window_bounds = array<i64: 8, 128>}, {pipeline_mode = #tpu.pipeline_mode<synchronous>, transform_indices = @transform_1, window_bounds = array<i64: 2, 1, 128>}, {pipeline_mode = #tpu.pipeline_mode<synchronous>, transform_indices = @transform_2, window_bounds = array<i64: 2, 1, 128>}, {pipeline_mode = #tpu.pipeline_mode<synchronous>, transform_indices = @transform_3, window_bounds = array<i64: 2, 128, 128>}, {pipeline_mode = #tpu.pipeline_mode<synchronous>, transform_indices = @transform_4, window_bounds = array<i64: 2, 1, 128>}, {pipeline_mode = #tpu.pipeline_mode<synchronous>, transform_indices = @transform_5, window_bounds = array<i64: 1, 128>}, {pipeline_mode = #tpu.pipeline_mode<synchronous>, transform_indices = @transform_6, window_bounds = array<i64: 1, 128>}, {transform_indices = @transform_7, window_bounds = array<i64: 8, 128>}]} {
    %c0 = arith.constant 0 : index
    %c0_0 = arith.constant 0 : index
    %0 = vector.load %arg1[%c0, %c0_0] : memref<8x128xf32, #tpu.memory_space<vmem>>, vector<8x128xf32>
    %c0_1 = arith.constant 0 : index
    %c0_2 = arith.constant 0 : index
    %c0_3 = arith.constant 0 : index
    %1 = vector.load %arg2[%c0_1, %c0_2, %c0_3] : memref<2x1x128xf32, #tpu.memory_space<vmem>>, vector<1x1x128xf32>
    %2 = vector.shape_cast %1 : vector<1x1x128xf32> to vector<1x128xf32>
    %c0_4 = arith.constant 0 : index
    %c0_5 = arith.constant 0 : index
    %c0_6 = arith.constant 0 : index
    %3 = vector.load %arg3[%c0_4, %c0_5, %c0_6] : memref<2x1x128xf32, #tpu.memory_space<vmem>>, vector<1x1x128xf32>
    %4 = vector.shape_cast %3 : vector<1x1x128xf32> to vector<1x128xf32>
    %cst = arith.constant dense<0.000000e+00> : vector<8xf32>
    %5 = vector.multi_reduction <add>, %0, %cst [1] : vector<8x128xf32> to vector<8xf32>
    %6 = vector.shape_cast %5 : vector<8xf32> to vector<8x1xf32>
    %cst_7 = arith.constant 1.280000e+02 : f32
    %7 = vector.broadcast %cst_7 : f32 to vector<8x1xf32>
    %8 = arith.divf %6, %7 : vector<8x1xf32>
    %9 = vector.broadcast %8 : vector<8x1xf32> to vector<8x128xf32>
    %10 = arith.subf %0, %9 : vector<8x128xf32>
    %11 = arith.mulf %10, %10 : vector<8x128xf32>
    %cst_8 = arith.constant dense<0.000000e+00> : vector<8xf32>
    %12 = vector.multi_reduction <add>, %11, %cst_8 [1] : vector<8x128xf32> to vector<8xf32>
    %13 = vector.shape_cast %12 : vector<8xf32> to vector<8x1xf32>
    %cst_9 = arith.constant 1.270000e+02 : f32
    %14 = vector.broadcast %cst_9 : f32 to vector<8x1xf32>
    %15 = arith.divf %13, %14 : vector<8x1xf32>
    %cst_10 = arith.constant 9.99999997E-7 : f32
    %16 = vector.broadcast %cst_10 : f32 to vector<8x1xf32>
    %17 = arith.addf %15, %16 : vector<8x1xf32>
    %18 = math.rsqrt %17 : vector<8x1xf32>
    %19 = vector.broadcast %18 : vector<8x1xf32> to vector<8x128xf32>
    %20 = arith.mulf %10, %19 : vector<8x128xf32>
    %21 = vector.broadcast %2 : vector<1x128xf32> to vector<8x128xf32>
    %22 = arith.mulf %21, %20 : vector<8x128xf32>
    %23 = vector.broadcast %4 : vector<1x128xf32> to vector<8x128xf32>
    %24 = arith.addf %22, %23 : vector<8x128xf32>
    %25 = arith.truncf %24 : vector<8x128xf32> to vector<8x128xbf16>
    %c0_11 = arith.constant 0 : index
    %c0_12 = arith.constant 0 : index
    %c0_13 = arith.constant 0 : index
    %26 = vector.load %arg4[%c0_11, %c0_12, %c0_13] : memref<2x128x128xbf16, #tpu.memory_space<vmem>>, vector<1x128x128xbf16>
    %27 = vector.shape_cast %26 : vector<1x128x128xbf16> to vector<128x128xbf16>
    %cst_14 = arith.constant dense<0.000000e+00> : vector<8x128xf32>
    %28 = tpu.matmul %25, %27, %cst_14 {dimension_numbers = #tpu.dot_dimension_numbers<[1], [0], [0], [1], [0, 0, 1, 1], [], []>} : vector<8x128xbf16>, vector<128x128xbf16>, vector<8x128xf32> -> vector<8x128xf32>
    %29 = arith.addf %0, %28 : vector<8x128xf32>
    %c0_15 = arith.constant 0 : index
    %c0_16 = arith.constant 0 : index
    %c0_17 = arith.constant 0 : index
    %30 = vector.load %arg5[%c0_15, %c0_16, %c0_17] : memref<2x1x128xf32, #tpu.memory_space<vmem>>, vector<1x1x128xf32>
    %31 = vector.shape_cast %30 : vector<1x1x128xf32> to vector<1x128xf32>
    %32 = vector.broadcast %31 : vector<1x128xf32> to vector<8x128xf32>
    %33 = arith.addf %29, %32 : vector<8x128xf32>
    %c1 = arith.constant 1 : index
    %c0_18 = arith.constant 0 : index
    %c0_19 = arith.constant 0 : index
    %34 = vector.load %arg2[%c1, %c0_18, %c0_19] : memref<2x1x128xf32, #tpu.memory_space<vmem>>, vector<1x1x128xf32>
    %35 = vector.shape_cast %34 : vector<1x1x128xf32> to vector<1x128xf32>
    %c1_20 = arith.constant 1 : index
    %c0_21 = arith.constant 0 : index
    %c0_22 = arith.constant 0 : index
    %36 = vector.load %arg3[%c1_20, %c0_21, %c0_22] : memref<2x1x128xf32, #tpu.memory_space<vmem>>, vector<1x1x128xf32>
    %37 = vector.shape_cast %36 : vector<1x1x128xf32> to vector<1x128xf32>
    %cst_23 = arith.constant dense<0.000000e+00> : vector<8xf32>
    %38 = vector.multi_reduction <add>, %33, %cst_23 [1] : vector<8x128xf32> to vector<8xf32>
    %39 = vector.shape_cast %38 : vector<8xf32> to vector<8x1xf32>
    %cst_24 = arith.constant 1.280000e+02 : f32
    %40 = vector.broadcast %cst_24 : f32 to vector<8x1xf32>
    %41 = arith.divf %39, %40 : vector<8x1xf32>
    %42 = vector.broadcast %41 : vector<8x1xf32> to vector<8x128xf32>
    %43 = arith.subf %33, %42 : vector<8x128xf32>
    %44 = arith.mulf %43, %43 : vector<8x128xf32>
    %cst_25 = arith.constant dense<0.000000e+00> : vector<8xf32>
    %45 = vector.multi_reduction <add>, %44, %cst_25 [1] : vector<8x128xf32> to vector<8xf32>
    %46 = vector.shape_cast %45 : vector<8xf32> to vector<8x1xf32>
    %cst_26 = arith.constant 1.270000e+02 : f32
    %47 = vector.broadcast %cst_26 : f32 to vector<8x1xf32>
    %48 = arith.divf %46, %47 : vector<8x1xf32>
    %cst_27 = arith.constant 9.99999997E-7 : f32
    %49 = vector.broadcast %cst_27 : f32 to vector<8x1xf32>
    %50 = arith.addf %48, %49 : vector<8x1xf32>
    %51 = math.rsqrt %50 : vector<8x1xf32>
    %52 = vector.broadcast %51 : vector<8x1xf32> to vector<8x128xf32>
    %53 = arith.mulf %43, %52 : vector<8x128xf32>
    %54 = vector.broadcast %35 : vector<1x128xf32> to vector<8x128xf32>
    %55 = arith.mulf %54, %53 : vector<8x128xf32>
    %56 = vector.broadcast %37 : vector<1x128xf32> to vector<8x128xf32>
    %57 = arith.addf %55, %56 : vector<8x128xf32>
    %58 = arith.truncf %57 : vector<8x128xf32> to vector<8x128xbf16>
    %c1_28 = arith.constant 1 : index
    %c0_29 = arith.constant 0 : index
    %c0_30 = arith.constant 0 : index
    %59 = vector.load %arg4[%c1_28, %c0_29, %c0_30] : memref<2x128x128xbf16, #tpu.memory_space<vmem>>, vector<1x128x128xbf16>
    %60 = vector.shape_cast %59 : vector<1x128x128xbf16> to vector<128x128xbf16>
    %cst_31 = arith.constant dense<0.000000e+00> : vector<8x128xf32>
    %61 = tpu.matmul %58, %60, %cst_31 {dimension_numbers = #tpu.dot_dimension_numbers<[1], [0], [0], [1], [0, 0, 1, 1], [], []>} : vector<8x128xbf16>, vector<128x128xbf16>, vector<8x128xf32> -> vector<8x128xf32>
    %62 = arith.addf %33, %61 : vector<8x128xf32>
    %c1_32 = arith.constant 1 : index
    %c0_33 = arith.constant 0 : index
    %c0_34 = arith.constant 0 : index
    %63 = vector.load %arg5[%c1_32, %c0_33, %c0_34] : memref<2x1x128xf32, #tpu.memory_space<vmem>>, vector<1x1x128xf32>
    %64 = vector.shape_cast %63 : vector<1x1x128xf32> to vector<1x128xf32>
    %65 = vector.broadcast %64 : vector<1x128xf32> to vector<8x128xf32>
    %66 = arith.addf %62, %65 : vector<8x128xf32>
    %c0_35 = arith.constant 0 : index
    %c0_36 = arith.constant 0 : index
    %67 = vector.load %arg6[%c0_35, %c0_36] : memref<1x128xf32, #tpu.memory_space<vmem>>, vector<1x128xf32>
    %c0_37 = arith.constant 0 : index
    %c0_38 = arith.constant 0 : index
    %68 = vector.load %arg7[%c0_37, %c0_38] : memref<1x128xf32, #tpu.memory_space<vmem>>, vector<1x128xf32>
    %cst_39 = arith.constant dense<0.000000e+00> : vector<8xf32>
    %69 = vector.multi_reduction <add>, %66, %cst_39 [1] : vector<8x128xf32> to vector<8xf32>
    %70 = vector.shape_cast %69 : vector<8xf32> to vector<8x1xf32>
    %cst_40 = arith.constant 1.280000e+02 : f32
    %71 = vector.broadcast %cst_40 : f32 to vector<8x1xf32>
    %72 = arith.divf %70, %71 : vector<8x1xf32>
    %73 = vector.broadcast %72 : vector<8x1xf32> to vector<8x128xf32>
    %74 = arith.subf %66, %73 : vector<8x128xf32>
    %75 = arith.mulf %74, %74 : vector<8x128xf32>
    %cst_41 = arith.constant dense<0.000000e+00> : vector<8xf32>
    %76 = vector.multi_reduction <add>, %75, %cst_41 [1] : vector<8x128xf32> to vector<8xf32>
    %77 = vector.shape_cast %76 : vector<8xf32> to vector<8x1xf32>
    %cst_42 = arith.constant 1.270000e+02 : f32
    %78 = vector.broadcast %cst_42 : f32 to vector<8x1xf32>
    %79 = arith.divf %77, %78 : vector<8x1xf32>
    %cst_43 = arith.constant 9.99999997E-7 : f32
    %80 = vector.broadcast %cst_43 : f32 to vector<8x1xf32>
    %81 = arith.addf %79, %80 : vector<8x1xf32>
    %82 = math.rsqrt %81 : vector<8x1xf32>
    %83 = vector.broadcast %82 : vector<8x1xf32> to vector<8x128xf32>
    %84 = arith.mulf %74, %83 : vector<8x128xf32>
    %85 = vector.broadcast %67 : vector<1x128xf32> to vector<8x128xf32>
    %86 = arith.mulf %85, %84 : vector<8x128xf32>
    %87 = vector.broadcast %68 : vector<1x128xf32> to vector<8x128xf32>
    %88 = arith.addf %86, %87 : vector<8x128xf32>
    %c0_44 = arith.constant 0 : index
    %c0_45 = arith.constant 0 : index
    %89 = vector.load %arg8[%c0_44, %c0_45] : memref<8x128xf32, #tpu.memory_space<vmem>>, vector<8x128xf32>
    tpu.vector_store %arg8[%c0_44, %c0_45], %88 {strides = array<i32>} : memref<8x128xf32, #tpu.memory_space<vmem>>, vector<8x128xf32>,
    return
  }
  func.func @transform_0(%arg0: i32) -> (i32, i32) {
    %c0_i32 = arith.constant 0 : i32
    %c0_i32_0 = arith.constant 0 : i32
    return %arg0, %c0_i32 : i32, i32
  }
  func.func @transform_1(%arg0: i32) -> (i32, i32, i32) {
    %c0_i32 = arith.constant 0 : i32
    %c0_i32_0 = arith.constant 0 : i32
    %c0_i32_1 = arith.constant 0 : i32
    %c0_i32_2 = arith.constant 0 : i32
    return %c0_i32, %c0_i32_0, %c0_i32_1 : i32, i32, i32
  }
  func.func @transform_2(%arg0: i32) -> (i32, i32, i32) {
    %c0_i32 = arith.constant 0 : i32
    %c0_i32_0 = arith.constant 0 : i32
    %c0_i32_1 = arith.constant 0 : i32
    %c0_i32_2 = arith.constant 0 : i32
    return %c0_i32, %c0_i32_0, %c0_i32_1 : i32, i32, i32
  }
  func.func @transform_3(%arg0: i32) -> (i32, i32, i32) {
    %c0_i32 = arith.constant 0 : i32
    %c0_i32_0 = arith.constant 0 : i32
    %c0_i32_1 = arith.constant 0 : i32
    %c0_i32_2 = arith.constant 0 : i32
    return %c0_i32, %c0_i32_0, %c0_i32_1 : i32, i32, i32
  }
  func.func @transform_4(%arg0: i32) -> (i32, i32, i32) {
    %c0_i32 = arith.constant 0 : i32
    %c0_i32_0 = arith.constant 0 : i32
    %c0_i32_1 = arith.constant 0 : i32
    %c0_i32_2 = arith.constant 0 : i32
    return %c0_i32, %c0_i32_0, %c0_i32_1 : i32, i32, i32
  }
  func.func @transform_5(%arg0: i32) -> (i32, i32) {
    %c0_i32 = arith.constant 0 : i32
    %c0_i32_0 = arith.constant 0 : i32
    %c0_i32_1 = arith.constant 0 : i32
    return %c0_i32, %c0_i32_0 : i32, i32
  }
  func.func @transform_6(%arg0: i32) -> (i32, i32) {
    %c0_i32 = arith.constant 0 : i32
    %c0_i32_0 = arith.constant 0 : i32
    %c0_i32_1 = arith.constant 0 : i32
    return %c0_i32, %c0_i32_0 : i32, i32
  }
  func.func @transform_7(%arg0: i32) -> (i32, i32) {
    %c0_i32 = arith.constant 0 : i32
    %c0_i32_0 = arith.constant 0 : i32
    return %arg0, %c0_i32 : i32, i32
  }
}

</mosaic_0001>

<llo_original>
// kernel: tpu_custom_call.1
$region0: #{tpu_custom_call.1}
  #allocation0 [shape = 'u32[]', space=smem, size = 0x4, offset = 0x4, fixed_abs, tag = 'smem constant byte address 0x4 - core index']
  #allocation1 [shape = 'u32[144,128]{1,0:T(1,128)}', space=vmem, size = 0x12000, scoped, tag = 'internal scratch']
  %s0 = inlined_call_operand.hbm [shape: f32[16,128], index: 0, kind: input, shape index: {}]
  %s1 = inlined_call_operand.vmem [shape: f32[2,1,128], index: 1, kind: input, shape index: {}]
  %s2 = inlined_call_operand.vmem [shape: f32[2,1,128], index: 2, kind: input, shape index: {}]
  %s3 = inlined_call_operand.hbm [shape: bf16[2,128,128], index: 3, kind: input, shape index: {}]
  %s4 = inlined_call_operand.vmem [shape: f32[2,1,128], index: 4, kind: input, shape index: {}]
  %s5 = inlined_call_operand.vmem [shape: f32[1,128], index: 5, kind: input, shape index: {}]
  %s6 = inlined_call_operand.vmem [shape: f32[1,128], index: 6, kind: input, shape index: {}]
  %s7 = inlined_call_operand.hbm [shape: f32[16,128], index: 7, kind: output, shape index: {}]
  %s8 = sld [smem:[#allocation0]]
  $region69: #{tpu_custom_call.1} parent=0
    _
  %s10 = ssub.s32 1, %s8
  %s11 = scalar_select 0, %s10, %s8
  $region1: #{tpu_custom_call.1} parent=0
    #allocation2 [shape = 'u8[8192]{0}', space=vmem, size = 0x2000, scoped, tag = 'input window, operand 0']
    #allocation3 [shape = 's32[2]{0}', space=sflag, size = 0x8, scoped, tag = 'scoped memory for tpu_custom_call.1']
    #allocation4 [shape = 's32[2]{0}', space=sflag, size = 0x8, scoped, tag = 'scoped memory for tpu_custom_call.1']
    #allocation5 [shape = 'u8[65536]{0}', space=vmem, size = 0x10000, scoped, tag = 'input window, operand 3, single buffered']
    #allocation6 [shape = 's32[1]{0}', space=sflag, size = 0x4, scoped, tag = 'scoped memory for tpu_custom_call.1']
    #allocation7 [shape = 'u8[8192]{0}', space=vmem, size = 0x2000, scoped, tag = 'output window, operand 0']
    %12 = vsyncpa [#allocation3], 0
    %s13 = scalar_lea.sflag [#allocation3], 1
    %14 = vsyncpa %s13, 0
    %15 = vsyncpa [#allocation6], 0
    %16 = vsyncpa [#allocation4], 0
    %s17 = scalar_lea.sflag [#allocation4], 1
    %18 = vsyncpa %s17, 0
    loop: start=0, step=1, limit=4
    $region2: #{tpu_custom_call.1} parent=1 // loop_pre_header
      _
    $region3: #{tpu_custom_call.1} parent=1 // loop_header
      %s20 = sphi 0, %s24
      %p21 = scmp.ge.s32.totalorder %s20, 4
      %s30 = sphi 0, %s32
      %s33 = sphi 0, %s30
      %s34 = sphi 0, %s33
      %s50 = sphi 0, %s34
      %s54 = sphi 0, %s54
      %s56 = sphi 0, %s54
      %s57 = sphi 0, %s56
      %s71 = sphi 0, %s57
      %s75 = sphi 0, %s75
      %s77 = sphi 0, %s75
      %s78 = sphi 0, %s77
      %s92 = sphi 0, %s78
      %s96 = sphi 0, %s96
      %s98 = sphi 0, %s96
      %s99 = sphi 0, %s98
      %s113 = sphi 0, %s99
      %s117 = sphi 0, %s117
      %s119 = sphi 0, %s117
      %s120 = sphi 0, %s119
      %s134 = sphi 0, %s120
      %s138 = sphi 0, %s138
      %s140 = sphi 0, %s138
      %s141 = sphi 0, %s140
      %s155 = sphi 0, %s141
      %s159 = sphi 0, %s159
      %s161 = sphi 0, %s159
      %s162 = sphi 0, %s161
      %s176 = sphi 0, %s162
      %s182 = sphi 0, %s184
      %s185 = sphi 0, %s182
      %s186 = sphi 0, %s185
      %s202 = sphi 0, %s186
    $region4: #{tpu_custom_call.1} parent=1 // loop_header_branch
      %23 = sbr.rel (%p21) target = $region8
    $region5: #{tpu_custom_call.1} parent=1 // loop_body
      %s25 = ssub.s32 %s20, 1
      %s26 = ssub.s32 %s20, 2
      %s27 = sadd.s32 %s20, 1
      %s28 = ssub.s32 %s20, %s27
      %p29 = scmp.eq.s32.totalorder %s28, 0
      %s31 = sadd.s32 %s30, 1
      %s32 = scalar_select %p29, %s30, %s31
      %p35 = pneg %p29
      %p36 = scmp.eq.s32.totalorder %s20, 1
      %p37 = por %p35, %p36
      %p38 = scmp.ne.s32.totalorder %s30, %s33
      %p39 = scmp.eq.s32.totalorder %s20, 0
      %p40 = por %p38, %p39
      %p41 = scmp.ne.s32.totalorder %s30, %s33
      %p42 = scmp.eq.s32.totalorder %s25, 1
      %p43 = por %p41, %p42
      %p44 = scmp.ne.s32.totalorder %s33, %s34
      %p45 = scmp.eq.s32.totalorder %s25, 0
      %p46 = por %p44, %p45
      %p47 = scmp.ne.s32.totalorder %s33, %s34
      %p48 = scmp.eq.s32.totalorder %s26, 1
      %p49 = por %p47, %p48
      %p51 = scmp.ne.s32.totalorder %s34, %s50
      %p52 = scmp.eq.s32.totalorder %s26, 0
      %p53 = por %p51, %p52
      %s55 = sadd.s32 %s54, 1
      %p58 = scmp.eq.s32.totalorder %s20, 1
      %p59 = scmp.ne.s32.totalorder %s54, %s56
      %p60 = scmp.eq.s32.totalorder %s20, 0
      %p61 = por %p59, %p60
      %p62 = scmp.ne.s32.totalorder %s54, %s56
      %p63 = scmp.eq.s32.totalorder %s25, 1
      %p64 = por %p62, %p63
      %p65 = scmp.ne.s32.totalorder %s56, %s57
      %p66 = scmp.eq.s32.totalorder %s25, 0
      %p67 = por %p65, %p66
      %p68 = scmp.ne.s32.totalorder %s56, %s57
      %p69 = scmp.eq.s32.totalorder %s26, 1
      %p70 = por %p68, %p69
      %p72 = scmp.ne.s32.totalorder %s57, %s71
      %p73 = scmp.eq.s32.totalorder %s26, 0
      %p74 = por %p72, %p73
      %s76 = sadd.s32 %s75, 1
      %p79 = scmp.eq.s32.totalorder %s20, 1
      %p80 = scmp.ne.s32.totalorder %s75, %s77
      %p81 = scmp.eq.s32.totalorder %s20, 0
      %p82 = por %p80, %p81
      %p83 = scmp.ne.s32.totalorder %s75, %s77
      %p84 = scmp.eq.s32.totalorder %s25, 1
      %p85 = por %p83, %p84
      %p86 = scmp.ne.s32.totalorder %s77, %s78
      %p87 = scmp.eq.s32.totalorder %s25, 0
      %p88 = por %p86, %p87
      %p89 = scmp.ne.s32.totalorder %s77, %s78
      %p90 = scmp.eq.s32.totalorder %s26, 1
      %p91 = por %p89, %p90
      %p93 = scmp.ne.s32.totalorder %s78, %s92
      %p94 = scmp.eq.s32.totalorder %s26, 0
      %p95 = por %p93, %p94
      %s97 = sadd.s32 %s96, 1
      %p100 = scmp.eq.s32.totalorder %s20, 1
      %p101 = scmp.ne.s32.totalorder %s96, %s98
      %p102 = scmp.eq.s32.totalorder %s20, 0
      %p103 = por %p101, %p102
      %p104 = scmp.ne.s32.totalorder %s96, %s98
      %p105 = scmp.eq.s32.totalorder %s25, 1
      %p106 = por %p104, %p105
      %p107 = scmp.ne.s32.totalorder %s98, %s99
      %p108 = scmp.eq.s32.totalorder %s25, 0
      %p109 = por %p107, %p108
      %p110 = scmp.ne.s32.totalorder %s98, %s99
      %p111 = scmp.eq.s32.totalorder %s26, 1
      %p112 = por %p110, %p111
      %p114 = scmp.ne.s32.totalorder %s99, %s113
      %p115 = scmp.eq.s32.totalorder %s26, 0
      %p116 = por %p114, %p115
      %s118 = sadd.s32 %s117, 1
      %p121 = scmp.eq.s32.totalorder %s20, 1
      %p122 = scmp.ne.s32.totalorder %s117, %s119
      %p123 = scmp.eq.s32.totalorder %s20, 0
      %p124 = por %p122, %p123
      %p125 = scmp.ne.s32.totalorder %s117, %s119
      %p126 = scmp.eq.s32.totalorder %s25, 1
      %p127 = por %p125, %p126
      %p128 = scmp.ne.s32.totalorder %s119, %s120
      %p129 = scmp.eq.s32.totalorder %s25, 0
      %p130 = por %p128, %p129
      %p131 = scmp.ne.s32.totalorder %s119, %s120
      %p132 = scmp.eq.s32.totalorder %s26, 1
      %p133 = por %p131, %p132
      %p135 = scmp.ne.s32.totalorder %s120, %s134
      %p136 = scmp.eq.s32.totalorder %s26, 0
      %p137 = por %p135, %p136
      %s139 = sadd.s32 %s138, 1
      %p142 = scmp.eq.s32.totalorder %s20, 1
      %p143 = scmp.ne.s32.totalorder %s138, %s140
      %p144 = scmp.eq.s32.totalorder %s20, 0
      %p145 = por %p143, %p144
      %p146 = scmp.ne.s32.totalorder %s138, %s140
      %p147 = scmp.eq.s32.totalorder %s25, 1
      %p148 = por %p146, %p147
      %p149 = scmp.ne.s32.totalorder %s140, %s141
      %p150 = scmp.eq.s32.totalorder %s25, 0
      %p151 = por %p149, %p150
      %p152 = scmp.ne.s32.totalorder %s140, %s141
      %p153 = scmp.eq.s32.totalorder %s26, 1
      %p154 = por %p152, %p153
      %p156 = scmp.ne.s32.totalorder %s141, %s155
      %p157 = scmp.eq.s32.totalorder %s26, 0
      %p158 = por %p156, %p157
      %s160 = sadd.s32 %s159, 1
      %p163 = scmp.eq.s32.totalorder %s20, 1
      %p164 = scmp.ne.s32.totalorder %s159, %s161
      %p165 = scmp.eq.s32.totalorder %s20, 0
      %p166 = por %p164, %p165
      %p167 = scmp.ne.s32.totalorder %s159, %s161
      %p168 = scmp.eq.s32.totalorder %s25, 1
      %p169 = por %p167, %p168
      %p170 = scmp.ne.s32.totalorder %s161, %s162
      %p171 = scmp.eq.s32.totalorder %s25, 0
      %p172 = por %p170, %p171
      %p173 = scmp.ne.s32.totalorder %s161, %s162
      %p174 = scmp.eq.s32.totalorder %s26, 1
      %p175 = por %p173, %p174
      %p177 = scmp.ne.s32.totalorder %s162, %s176
      %p178 = scmp.eq.s32.totalorder %s26, 0
      %p179 = por %p177, %p178
      %s180 = ssub.s32 %s20, %s27
      %p181 = scmp.eq.s32.totalorder %s180, 0
      %s183 = sadd.s32 %s182, 1
      %s184 = scalar_select %p181, %s182, %s183
      %p187 = pneg %p181
      %p188 = scmp.eq.s32.totalorder %s20, 1
      %p189 = por %p187, %p188
      %p190 = scmp.ne.s32.totalorder %s182, %s185
      %p191 = scmp.eq.s32.totalorder %s20, 0
      %p192 = por %p190, %p191
      %p193 = scmp.ne.s32.totalorder %s182, %s185
      %p194 = scmp.eq.s32.totalorder %s25, 1
      %p195 = por %p193, %p194
      %p196 = scmp.ne.s32.totalorder %s185, %s186
      %p197 = scmp.eq.s32.totalorder %s25, 0
      %p198 = por %p196, %p197
      %p199 = scmp.ne.s32.totalorder %s185, %s186
      %p200 = scmp.eq.s32.totalorder %s26, 1
      %p201 = por %p199, %p200
      %p203 = scmp.ne.s32.totalorder %s186, %s202
      %p204 = scmp.eq.s32.totalorder %s26, 0
      %p205 = por %p203, %p204
      %p206 = scmp.le.s32.totalorder 1, %s20
      %p207 = scmp.lt.s32.totalorder %s20, 3
      %p208 = pnand %p206, %p207
      %p209 = pneg %p208
      // Predicated region
      $region9: #{tpu_custom_call.1} parent=5 // pred_check
        _
      $region10: #{tpu_custom_call.1} parent=5 // pred_check_branch
        %211 = sbr.rel (%p208) target = $region12
      $region11: #{tpu_custom_call.1} parent=5 // pred_region
        %s212 = ssub.s32 %s20, 1
        // Predicated region
        $region13: #{tpu_custom_call.1} parent=11 // pred_check
          %p213 = pneg %p67
        $region14: #{tpu_custom_call.1} parent=11 // pred_check_branch
          %215 = sbr.rel (%p213) target = $region16
        $region15: #{tpu_custom_call.1} parent=11 // pred_region
          _
        $region16: #{tpu_custom_call.1} parent=11 // pred_fallthru
          _
        // Predicated region
        $region17: #{tpu_custom_call.1} parent=11 // pred_check
          %p216 = pneg %p88
        $region18: #{tpu_custom_call.1} parent=11 // pred_check_branch
          %218 = sbr.rel (%p216) target = $region20
        $region19: #{tpu_custom_call.1} parent=11 // pred_region
          _
        $region20: #{tpu_custom_call.1} parent=11 // pred_fallthru
          _
        // Predicated region
        $region21: #{tpu_custom_call.1} parent=11 // pred_check
          %p219 = pneg %p109
        $region22: #{tpu_custom_call.1} parent=11 // pred_check_branch
          %221 = sbr.rel (%p219) target = $region24
        $region23: #{tpu_custom_call.1} parent=11 // pred_region
          %s223 = ssub.s32 2048, 2048
          %224 = vsyncadd [#allocation6], %s223
          %s225 = sshll.u32 [#allocation5], 4
          %s226 = int_to_ptr.vmem [resolvable:$true] %s225
          %231 = dma.hbm_to_vmem [thread:$0]  %s3, 2048, %s226, [#allocation6], 64, 64, 4
        $region24: #{tpu_custom_call.1} parent=11 // pred_fallthru
          _
        // Predicated region
        $region25: #{tpu_custom_call.1} parent=11 // pred_check
          %p232 = pneg %p130
        $region26: #{tpu_custom_call.1} parent=11 // pred_check_branch
          %234 = sbr.rel (%p232) target = $region28
        $region27: #{tpu_custom_call.1} parent=11 // pred_region
          _
        $region28: #{tpu_custom_call.1} parent=11 // pred_fallthru
          _
        // Predicated region
        $region29: #{tpu_custom_call.1} parent=11 // pred_check
          %p235 = pneg %p151
        $region30: #{tpu_custom_call.1} parent=11 // pred_check_branch
          %237 = sbr.rel (%p235) target = $region32
        $region31: #{tpu_custom_call.1} parent=11 // pred_region
          _
        $region32: #{tpu_custom_call.1} parent=11 // pred_fallthru
          _
        // Predicated region
        $region33: #{tpu_custom_call.1} parent=11 // pred_check
          %p238 = pneg %p172
        $region34: #{tpu_custom_call.1} parent=11 // pred_check_branch
          %240 = sbr.rel (%p238) target = $region36
        $region35: #{tpu_custom_call.1} parent=11 // pred_region
          _
        $region36: #{tpu_custom_call.1} parent=11 // pred_fallthru
          _
      $region12: #{tpu_custom_call.1} parent=5 // pred_fallthru
        _
      %p241 = scmp.lt.s32.totalorder %s20, 2
      // Predicated region
      $region37: #{tpu_custom_call.1} parent=5 // pred_check
        %p242 = pneg %p241
      $region38: #{tpu_custom_call.1} parent=5 // pred_check_branch
        %244 = sbr.rel (%p242) target = $region40
      $region39: #{tpu_custom_call.1} parent=5 // pred_region
        // Predicated region
        $region41: #{tpu_custom_call.1} parent=39 // pred_check
          %p245 = pneg %p40
        $region42: #{tpu_custom_call.1} parent=39 // pred_check_branch
          %247 = sbr.rel (%p245) target = $region44
        $region43: #{tpu_custom_call.1} parent=39 // pred_region
          %s248 = sand.u32 %s30, 1
          %s249 = scalar_lea.sflag [#allocation3], %s248
          %s250 = sand.u32 %s30, 1
          %s251 = smul.addr %s250, 8
          %s252 = scalar_lea.vmem [#allocation2], %s251
          %s254 = ssub.s32 128, 128
          %255 = vsyncadd %s249, %s254
          %s256 = smul.addr %s20, 128
          %s257 = scalar_lea.hbm %s0, %s256
          %s259 = sshll.u32 %s252, 4
          %s260 = int_to_ptr.vmem [resolvable:$true] %s259
          %262 = dma.hbm_to_vmem [thread:$0]  %s257, 128, %s260, %s249
        $region44: #{tpu_custom_call.1} parent=39 // pred_fallthru
          _
      $region40: #{tpu_custom_call.1} parent=5 // pred_fallthru
        _
      %p263 = scmp.le.s32.totalorder 1, %s20
      %p264 = scmp.lt.s32.totalorder %s20, 3
      %p265 = pnand %p263, %p264
      %p266 = pneg %p265
      // Predicated region
      $region45: #{tpu_custom_call.1} parent=5 // pred_check
        _
      $region46: #{tpu_custom_call.1} parent=5 // pred_check_branch
        %268 = sbr.rel (%p265) target = $region48
      $region47: #{tpu_custom_call.1} parent=5 // pred_region
        %s269 = ssub.s32 %s20, 1
        %s270 = sand.u32 %s33, 1
        %s271 = scalar_lea.sflag [#allocation3], %s270
        %s272 = sand.u32 %s33, 1
        %s273 = smul.addr %s272, 8
        %s274 = scalar_lea.vmem [#allocation2], %s273
        // Predicated region
        $region49: #{tpu_custom_call.1} parent=47 // pred_check
          %p275 = pneg %p46
        $region50: #{tpu_custom_call.1} parent=47 // pred_check_branch
          %277 = sbr.rel (%p275) target = $region52
        $region51: #{tpu_custom_call.1} parent=47 // pred_region
          %278 = dma.done %s271, 128
        $region52: #{tpu_custom_call.1} parent=47 // pred_fallthru
          _
        // Predicated region
        $region53: #{tpu_custom_call.1} parent=47 // pred_check
          %p279 = pneg %p109
        $region54: #{tpu_custom_call.1} parent=47 // pred_check_branch
          %281 = sbr.rel (%p279) target = $region56
        $region55: #{tpu_custom_call.1} parent=47 // pred_region
          %282 = dma.done [#allocation6], 2048
        $region56: #{tpu_custom_call.1} parent=47 // pred_fallthru
          _
        %s283 = sand.u32 %s33, 1
        %s284 = scalar_lea.sflag [#allocation3], %s283
        %s285 = sand.u32 %s33, 1
        %s286 = smul.addr %s285, 8
        %s287 = scalar_lea.vmem [#allocation2], %s286
        %p288 = pneg %p46
        %p289 = pneg %p43
        %p290 = pneg %p67
        %p291 = pneg %p64
        %p292 = pneg %p88
        %p293 = pneg %p85
        %p294 = pneg %p109
        %p295 = pneg %p106
        %p296 = pneg %p130
        %p297 = pneg %p127
        %p298 = pneg %p151
        %p299 = pneg %p148
        %p300 = pneg %p172
        %p301 = pneg %p169
        %p302 = pneg %p198
        %p303 = pneg %p195
        %s304 = sand.u32 %s185, 1
        %s305 = scalar_lea.sflag [#allocation4], %s304
        %s306 = sand.u32 %s185, 1
        %s307 = smul.addr %s306, 8
        %s308 = scalar_lea.vmem [#allocation7], %s307
        %v310 = vld [vmem:[%s274] sm:$0xff]
        %v311 = vld [vmem:[%s1] sm:$0x1]
        %v312 = vld [vmem:[%s2] sm:$0x1]
        %313 = vadd.xlane.f32.xlu0 %v310
        %v314 = vpop.xlane.xlu0 %313
        %v315 = vrcp.pop 128.0
        %v316 = vmul.f32 %v314, %v315
        %v317 = vsub.f32 %v310, %v316
        %v318 = vmul.f32 %v317, %v317
        %319 = vadd.xlane.f32.xlu0 %v318
        %v320 = vpop.xlane.xlu0 %319
        %v321 = vrcp.pop 127.0
        %v322 = vmul.f32 %v320, %v321
        %v323 = vadd.f32 %v322, 1e-06
        %v324 = vrsqrt.pop %v323
        %v325 = vmul.f32 %v317, %v324
        %v327 = vlaneseq
        %v328 = vshrl.u32 %v327, 7
        %v329 = vsub.s32 0, %v328
        %v330 = vrot.slane %v311, %v329
        %v332 = vmul.f32 %v330, %v325
        %v334 = vlaneseq
        %v335 = vshrl.u32 %v334, 7
        %v336 = vsub.s32 0, %v335
        %v337 = vrot.slane %v312, %v336
        %v339 = vadd.f32 %v332, %v337
        %v340 = vpack.c.bf16 %v339, %v339
        %v341 = vld [vmem:[#allocation5] sm:$0xf]
        %v342 = vld [vmem:[#allocation5 + $0x4] sm:$0xf]
        %v343 = vld [vmem:[#allocation5 + $0x8] sm:$0xf]
        %v344 = vld [vmem:[#allocation5 + $0xc] sm:$0xf]
        %v345 = vld [vmem:[#allocation5 + $0x10] sm:$0xf]
        %v346 = vld [vmem:[#allocation5 + $0x14] sm:$0xf]
        %v347 = vld [vmem:[#allocation5 + $0x18] sm:$0xf]
        %v348 = vld [vmem:[#allocation5 + $0x1c] sm:$0xf]
        %v349 = vld [vmem:[#allocation5 + $0x20] sm:$0xf]
        %v350 = vld [vmem:[#allocation5 + $0x24] sm:$0xf]
        %v351 = vld [vmem:[#allocation5 + $0x28] sm:$0xf]
        %v352 = vld [vmem:[#allocation5 + $0x2c] sm:$0xf]
        %v353 = vld [vmem:[#allocation5 + $0x30] sm:$0xf]
        %v354 = vld [vmem:[#allocation5 + $0x34] sm:$0xf]
        %v355 = vld [vmem:[#allocation5 + $0x38] sm:$0xf]
        %v356 = vld [vmem:[#allocation5 + $0x3c] sm:$0xf]
        %v373 = vunpack.c.l.b16 %v341
        %v374 = vunpack.c.l.b16 %v342
        %v375 = vunpack.c.l.b16 %v343
        %v376 = vunpack.c.l.b16 %v344
        %v377 = vunpack.c.l.b16 %v345
        %v378 = vunpack.c.l.b16 %v346
        %v379 = vunpack.c.l.b16 %v347
        %v380 = vunpack.c.l.b16 %v348
        %v381 = vunpack.c.l.b16 %v349
        %v382 = vunpack.c.l.b16 %v350
        %v383 = vunpack.c.l.b16 %v351
        %v384 = vunpack.c.l.b16 %v352
        %v385 = vunpack.c.l.b16 %v353
        %v386 = vunpack.c.l.b16 %v354
        %v387 = vunpack.c.l.b16 %v355
        %v388 = vunpack.c.l.b16 %v356
        %v389 = vpack.c.b16 %v374, %v373
        %v390 = vpack.c.b16 %v376, %v375
        %v391 = vpack.c.b16 %v378, %v377
        %v392 = vpack.c.b16 %v380, %v379
        %v393 = vpack.c.b16 %v382, %v381
        %v394 = vpack.c.b16 %v384, %v383
        %v395 = vpack.c.b16 %v386, %v385
        %v396 = vpack.c.b16 %v388, %v387
        %405 = vmatprep.subr.bf16.mxu0 0
        %406 = vmatpush1.bf16.msra.mxu0 %v389
        %407 = vmatprep.subr.bf16.mxu0 0
        %408 = vmatpush1.bf16.msra.mxu0 %v390
        %409 = vmatprep.subr.bf16.mxu0 0
        %410 = vmatpush1.bf16.msra.mxu0 %v391
        %411 = vmatprep.subr.bf16.mxu0 0
        %412 = vmatpush1.bf16.msra.mxu0 %v392
        %413 = vmatprep.subr.bf16.mxu0 0
        %414 = vmatpush1.bf16.msra.mxu0 %v393
        %415 = vmatprep.subr.bf16.mxu0 0
        %416 = vmatpush1.bf16.msra.mxu0 %v394
        %417 = vmatprep.subr.bf16.mxu0 0
        %418 = vmatpush1.bf16.msra.mxu0 %v395
        %419 = vmatprep.subr.bf16.mxu0 0
        %420 = vmatpush1.bf16.msra.mxu0 %v396
        %421 = vmatprep.subr.bf16.mxu0 0
        %422 = vmatpush1.bf16.msra.mxu0 0
        %423 = vmatprep.subr.bf16.mxu0 0
        %424 = vmatpush1.bf16.msra.mxu0 0
        %425 = vmatprep.subr.bf16.mxu0 0
        %426 = vmatpush1.bf16.msra.mxu0 0
        %427 = vmatprep.subr.bf16.mxu0 0
        %428 = vmatpush1.bf16.msra.mxu0 0
        %429 = vmatprep.subr.bf16.mxu0 0
        %430 = vmatpush1.bf16.msra.mxu0 0
        %431 = vmatprep.subr.bf16.mxu0 0
        %432 = vmatpush1.bf16.msra.mxu0 0
        %433 = vmatprep.subr.bf16.mxu0 0
        %434 = vmatpush1.bf16.msra.mxu0 0
        %435 = vmatprep.subr.bf16.mxu0 0
        %436 = vmatpush1.bf16.msra.mxu0 0
        %437 = vmatprep.mubr.bf16.mxu0 0
        %438 = vmatmul.mubr.bf16.gmra.mrb[0].mxu0 %v340
        %v439 = vpop.f32.mrb[0].mxu0
        %v440 = vadd.f32 0.0, %v439
        %v441 = vpop.f32.mrb[0].mxu0
        %v442 = vpop.f32.mrb[0].mxu0
        %v443 = vpop.f32.mrb[0].mxu0
        %444 = vdwg.mxu0
        %v445 = vadd.f32 %v310, %v440
        %v446 = vld [vmem:[%s4] sm:$0x1]
        %v448 = vlaneseq
        %v449 = vshrl.u32 %v448, 7
        %v450 = vsub.s32 0, %v449
        %v451 = vrot.slane %v446, %v450
        %v453 = vadd.f32 %v445, %v451
        %s454 = scalar_lea.vmem %s1, 1
        %v455 = vld [vmem:[%s454] sm:$0x1]
        %s456 = scalar_lea.vmem %s2, 1
        %v457 = vld [vmem:[%s456] sm:$0x1]
        %458 = vadd.xlane.f32.xlu0 %v453
        %v459 = vpop.xlane.xlu0 %458
        %v460 = vmul.f32 %v459, %v315
        %v461 = vsub.f32 %v453, %v460
        %v462 = vmul.f32 %v461, %v461
        %463 = vadd.xlane.f32.xlu0 %v462
        %v464 = vpop.xlane.xlu0 %463
        %v465 = vmul.f32 %v464, %v321
        %v466 = vadd.f32 %v465, 1e-06
        %v467 = vrsqrt.pop %v466
        %v468 = vmul.f32 %v461, %v467
        %v470 = vlaneseq
        %v471 = vshrl.u32 %v470, 7
        %v472 = vsub.s32 0, %v471
        %v473 = vrot.slane %v455, %v472
        %v475 = vmul.f32 %v473, %v468
        %v477 = vlaneseq
        %v478 = vshrl.u32 %v477, 7
        %v479 = vsub.s32 0, %v478
        %v480 = vrot.slane %v457, %v479
        %v482 = vadd.f32 %v475, %v480
        %v483 = vpack.c.bf16 %v482, %v482
        %s484 = scalar_lea.vmem [#allocation5], 64
        %v485 = vld [vmem:[%s484] sm:$0xf]
        %v486 = vld [vmem:[%s484 + $0x4] sm:$0xf]
        %v487 = vld [vmem:[%s484 + $0x8] sm:$0xf]
        %v488 = vld [vmem:[%s484 + $0xc] sm:$0xf]
        %v489 = vld [vmem:[%s484 + $0x10] sm:$0xf]
        %v490 = vld [vmem:[%s484 + $0x14] sm:$0xf]
        %v491 = vld [vmem:[%s484 + $0x18] sm:$0xf]
        %v492 = vld [vmem:[%s484 + $0x1c] sm:$0xf]
        %v493 = vld [vmem:[%s484 + $0x20] sm:$0xf]
        %v494 = vld [vmem:[%s484 + $0x24] sm:$0xf]
        %v495 = vld [vmem:[%s484 + $0x28] sm:$0xf]
        %v496 = vld [vmem:[%s484 + $0x2c] sm:$0xf]
        %v497 = vld [vmem:[%s484 + $0x30] sm:$0xf]
        %v498 = vld [vmem:[%s484 + $0x34] sm:$0xf]
        %v499 = vld [vmem:[%s484 + $0x38] sm:$0xf]
        %v500 = vld [vmem:[%s484 + $0x3c] sm:$0xf]
        %v517 = vunpack.c.l.b16 %v485
        %v518 = vunpack.c.l.b16 %v486
        %v519 = vunpack.c.l.b16 %v487
        %v520 = vunpack.c.l.b16 %v488
        %v521 = vunpack.c.l.b16 %v489
        %v522 = vunpack.c.l.b16 %v490
        %v523 = vunpack.c.l.b16 %v491
        %v524 = vunpack.c.l.b16 %v492
        %v525 = vunpack.c.l.b16 %v493
        %v526 = vunpack.c.l.b16 %v494
        %v527 = vunpack.c.l.b16 %v495
        %v528 = vunpack.c.l.b16 %v496
        %v529 = vunpack.c.l.b16 %v497
        %v530 = vunpack.c.l.b16 %v498
        %v531 = vunpack.c.l.b16 %v499
        %v532 = vunpack.c.l.b16 %v500
        %v533 = vpack.c.b16 %v518, %v517
        %v534 = vpack.c.b16 %v520, %v519
        %v535 = vpack.c.b16 %v522, %v521
        %v536 = vpack.c.b16 %v524, %v523
        %v537 = vpack.c.b16 %v526, %v525
        %v538 = vpack.c.b16 %v528, %v527
        %v539 = vpack.c.b16 %v530, %v529
        %v540 = vpack.c.b16 %v532, %v531
        %549 = vmatprep.subr.bf16.mxu0 0
        %550 = vmatpush1.bf16.msra.mxu0 %v533
        %551 = vmatprep.subr.bf16.mxu0 0
        %552 = vmatpush1.bf16.msra.mxu0 %v534
        %553 = vmatprep.subr.bf16.mxu0 0
        %554 = vmatpush1.bf16.msra.mxu0 %v535
        %555 = vmatprep.subr.bf16.mxu0 0
        %556 = vmatpush1.bf16.msra.mxu0 %v536
        %557 = vmatprep.subr.bf16.mxu0 0
        %558 = vmatpush1.bf16.msra.mxu0 %v537
        %559 = vmatprep.subr.bf16.mxu0 0
        %560 = vmatpush1.bf16.msra.mxu0 %v538
        %561 = vmatprep.subr.bf16.mxu0 0
        %562 = vmatpush1.bf16.msra.mxu0 %v539
        %563 = vmatprep.subr.bf16.mxu0 0
        %564 = vmatpush1.bf16.msra.mxu0 %v540
        %565 = vmatprep.subr.bf16.mxu0 0
        %566 = vmatpush1.bf16.msra.mxu0 0
        %567 = vmatprep.subr.bf16.mxu0 0
        %568 = vmatpush1.bf16.msra.mxu0 0
        %569 = vmatprep.subr.bf16.mxu0 0
        %570 = vmatpush1.bf16.msra.mxu0 0
        %571 = vmatprep.subr.bf16.mxu0 0
        %572 = vmatpush1.bf16.msra.mxu0 0
        %573 = vmatprep.subr.bf16.mxu0 0
        %574 = vmatpush1.bf16.msra.mxu0 0
        %575 = vmatprep.subr.bf16.mxu0 0
        %576 = vmatpush1.bf16.msra.mxu0 0
        %577 = vmatprep.subr.bf16.mxu0 0
        %578 = vmatpush1.bf16.msra.mxu0 0
        %579 = vmatprep.subr.bf16.mxu0 0
        %580 = vmatpush1.bf16.msra.mxu0 0
        %581 = vmatprep.mubr.bf16.mxu0 0
        %582 = vmatmul.mubr.bf16.gmra.mrb[0].mxu0 %v483
        %v583 = vpop.f32.mrb[0].mxu0
        %v584 = vadd.f32 0.0, %v583
        %v585 = vpop.f32.mrb[0].mxu0
        %v586 = vpop.f32.mrb[0].mxu0
        %v587 = vpop.f32.mrb[0].mxu0
        %588 = vdwg.mxu0
        %v589 = vadd.f32 %v453, %v584
        %s590 = scalar_lea.vmem %s4, 1
        %v591 = vld [vmem:[%s590] sm:$0x1]
        %v593 = vlaneseq
        %v594 = vshrl.u32 %v593, 7
        %v595 = vsub.s32 0, %v594
        %v596 = vrot.slane %v591, %v595
        %v598 = vadd.f32 %v589, %v596
        %v599 = vld [vmem:[%s5] sm:$0x1]
        %v600 = vld [vmem:[%s6] sm:$0x1]
        %601 = vadd.xlane.f32.xlu0 %v598
        %v602 = vpop.xlane.xlu0 %601
        %v603 = vmul.f32 %v602, %v315
        %v604 = vsub.f32 %v598, %v603
        %v605 = vmul.f32 %v604, %v604
        %606 = vadd.xlane.f32.xlu0 %v605
        %v607 = vpop.xlane.xlu0 %606
        %v608 = vmul.f32 %v607, %v321
        %v609 = vadd.f32 %v608, 1e-06
        %v610 = vrsqrt.pop %v609
        %v611 = vmul.f32 %v604, %v610
        %v613 = vlaneseq
        %v614 = vshrl.u32 %v613, 7
        %v615 = vsub.s32 0, %v614
        %v616 = vrot.slane %v599, %v615
        %v618 = vmul.f32 %v616, %v611
        %v620 = vlaneseq
        %v621 = vshrl.u32 %v620, 7
        %v622 = vsub.s32 0, %v621
        %v623 = vrot.slane %v600, %v622
        %v625 = vadd.f32 %v618, %v623
        %626 = vst [vmem:[%s308] sm:$0xff] %v625
        %s627 = sand.u32 %s185, 1
        %s628 = scalar_lea.sflag [#allocation4], %s627
        %s629 = sand.u32 %s185, 1
        %s630 = smul.addr %s629, 8
        %s631 = scalar_lea.vmem [#allocation7], %s630
        // Predicated region
        $region57: #{tpu_custom_call.1} parent=47 // pred_check
          %p632 = pneg %p195
        $region58: #{tpu_custom_call.1} parent=47 // pred_check_branch
          %634 = sbr.rel (%p632) target = $region60
        $region59: #{tpu_custom_call.1} parent=47 // pred_region
          %s636 = ssub.s32 128, 128
          %637 = vsyncadd %s628, %s636
          %s638 = smul.addr %s25, 128
          %s639 = scalar_lea.hbm %s7, %s638
          %s641 = sshll.u32 %s631, 4
          %s642 = int_to_ptr.vmem [resolvable:$true] %s641
          %644 = dma.vmem_to_hbm [thread:$0]  %s642, 128, %s639, %s628
        $region60: #{tpu_custom_call.1} parent=47 // pred_fallthru
          _
      $region48: #{tpu_custom_call.1} parent=5 // pred_fallthru
        _
      %p645 = scmp.le.s32.totalorder 2, %s20
      // Predicated region
      $region61: #{tpu_custom_call.1} parent=5 // pred_check
        %p646 = pneg %p645
      $region62: #{tpu_custom_call.1} parent=5 // pred_check_branch
        %648 = sbr.rel (%p646) target = $region64
      $region63: #{tpu_custom_call.1} parent=5 // pred_region
        %s649 = ssub.s32 %s20, 2
        // Predicated region
        $region65: #{tpu_custom_call.1} parent=63 // pred_check
          %p650 = pneg %p201
        $region66: #{tpu_custom_call.1} parent=63 // pred_check_branch
          %652 = sbr.rel (%p650) target = $region68
        $region67: #{tpu_custom_call.1} parent=63 // pred_region
          %s653 = sand.u32 %s186, 1
          %s654 = scalar_lea.sflag [#allocation4], %s653
          %s655 = sand.u32 %s186, 1
          %s656 = smul.addr %s655, 8
          %s657 = scalar_lea.vmem [#allocation7], %s656
          %658 = dma.done %s654, 128
        $region68: #{tpu_custom_call.1} parent=63 // pred_fallthru
          _
      $region64: #{tpu_custom_call.1} parent=5 // pred_fallthru
        _
    $region6: #{tpu_custom_call.1} parent=1 // loop_footer
      %s24 = sadd.s32 1, %s20
    $region7: #{tpu_custom_call.1} parent=1 // loop_footer_branch
      %19 = sbr.rel target = $region3
    $region8: #{tpu_custom_call.1} parent=1 // loop_exit
      _
    %659 = vsyncpa [#allocation3], 1
    %s660 = scalar_lea.sflag [#allocation3], 1
    %661 = vsyncpa %s660, 1
    %662 = vsyncpa [#allocation6], 1
    %663 = vsyncpa [#allocation4], 1
    %s664 = scalar_lea.sflag [#allocation4], 1
    %665 = vsyncpa %s664, 1

</llo_original>
